<compile_context>
chip_gen: v5e
topology: v5e:2x2
jax: 0.10.0
libtpu: 0.0.40
codegen_flags: <defaults>
</compile_context>

<pallas_src>
import functools

import jax
import jax.numpy as jnp
from jax.experimental import pallas as pl
from jax.experimental.pallas import tpu as pltpu


def _round_up(x, m):
    return ((x + m - 1) // m) * m


def _chain_kernel(x_ref, w1_ref, w2_ref, w3_ref, w4_ref, o_ref, *, compute_dtype):
    # ((((x @ W1) @ W2) @ W3) @ W4); f32 accumulation, operands in compute_dtype.
    x = x_ref[...].astype(compute_dtype)  # per-tile cast: no extra HBM pass
    t = jnp.dot(x, w1_ref[...], preferred_element_type=jnp.float32)
    t = jnp.dot(t.astype(compute_dtype), w2_ref[...], preferred_element_type=jnp.float32)
    t = jnp.dot(t.astype(compute_dtype), w3_ref[...], preferred_element_type=jnp.float32)
    t = jnp.dot(t.astype(compute_dtype), w4_ref[...], preferred_element_type=jnp.float32)
    o_ref[...] = t.astype(o_ref.dtype)


def _collapsed_kernel(x_ref, wc_ref, o_ref, *, compute_dtype):
    # Single streaming matmul against the pre-collapsed weight Wc = W1@W2@W3@W4.
    x = x_ref[...].astype(compute_dtype)
    o_ref[...] = jnp.dot(x, wc_ref[...], preferred_element_type=jnp.float32).astype(o_ref.dtype)


def _choose_tm(A):
    """Row tile: multiple of 16, capped at 512, >=2 grid steps when possible."""
    if A <= 16:
        return A  # single block; equals the full dim -> always legal
    tm = min(512, _round_up(pl.cdiv(A, 2), 16))
    return min(tm, _round_up(A, 16))


def tensor_contract(inputs, W1, W2, W3, W4, *, compute_dtype=jnp.bfloat16,
                    collapse="auto"):
    """einsum('ab,bc,cd,de,ef->af', inputs, W1, W2, W3, W4) via Pallas TPU."""
    A, B = inputs.shape
    _, C = W1.shape
    _, D = W2.shape
    _, E = W3.shape
    _, F = W4.shape

    out_dtype = inputs.dtype
    cdt = jnp.dtype(compute_dtype)

    if collapse == "auto":
        # Folding the weight chain pays off once its one-time cost is amortized
        # over enough rows of x.
        collapse = A >= 2 * max(B, C, D, E)

    TM = _choose_tm(A)
    grid = (pl.cdiv(A, TM),)

    xb = jnp.dtype(inputs.dtype).itemsize
    wb = cdt.itemsize
    ob = jnp.dtype(out_dtype).itemsize

    if collapse:
        # Tiny one-time chain in f32 (plain XLA), single cast for the MXU.
        wc = (W1.astype(jnp.float32) @ W2.astype(jnp.float32)
              @ W3.astype(jnp.float32) @ W4.astype(jnp.float32)).astype(cdt)
        kernel = functools.partial(_collapsed_kernel, compute_dtype=cdt)
        in_specs = [
            pl.BlockSpec((TM, B), lambda i: (i, 0)),  # x: streamed over rows
            pl.BlockSpec((B, F), lambda i: (0, 0)),   # collapsed weight: resident
        ]
        operands = (inputs, wc)
        flops = 2 * A * B * F
        bytes_accessed = xb * A * B + wb * B * F + ob * A * F
        resident_w = wb * B * F
    else:
        # Weight casts are tiny and hoist/fuse under jit across calls
        # (weights are module parameters in the PyTorch module).
        w1 = W1.astype(cdt)
        w2 = W2.astype(cdt)
        w3 = W3.astype(cdt)
        w4 = W4.astype(cdt)
        kernel = functools.partial(_chain_kernel, compute_dtype=cdt)
        in_specs = [
            pl.BlockSpec((TM, B), lambda i: (i, 0)),  # x: streamed over rows
            pl.BlockSpec((B, C), lambda i: (0, 0)),   # weights: resident in VMEM
            pl.BlockSpec((C, D), lambda i: (0, 0)),
            pl.BlockSpec((D, E), lambda i: (0, 0)),
            pl.BlockSpec((E, F), lambda i: (0, 0)),
        ]
        operands = (inputs, w1, w2, w3, w4)
        flops = 2 * A * (B * C + C * D + D * E + E * F)
        bytes_accessed = (xb * A * B
                          + wb * (B * C + C * D + D * E + E * F)
                          + ob * A * F)
        resident_w = wb * (B * C + C * D + D * E + E * F)

    # Explicit VMEM budget: double-buffered x/out tiles + (double-buffered)
    # resident weights + headroom.  Floor at the 32 MiB scoped default, cap at
    # v7x's 64 MiB physical VMEM (harmless on v5e/v6e's 128 MiB).
    tile_bytes = 2 * (TM * B * xb + TM * F * ob) + 2 * resident_w
    vmem_limit = min(64 * 2**20, max(32 * 2**20, int(tile_bytes * 1.5)))

    return pl.pallas_call(
        kernel,
        out_shape=jax.ShapeDtypeStruct((A, F), out_dtype),
        grid=grid,
        in_specs=in_specs,
        out_specs=pl.BlockSpec((TM, F), lambda i: (i, 0)),
        compiler_params=pltpu.CompilerParams(
            dimension_semantics=("parallel",),
            vmem_limit_bytes=vmem_limit,
        ),
        cost_estimate=pl.CostEstimate(
            flops=flops, transcendentals=0, bytes_accessed=bytes_accessed),
    )(*operands)


if __name__ == "__main__":
    key = jax.random.PRNGKey(0)
    k0, k1, k2, k3, k4, k5 = jax.random.split(key, 6)

    # Small shapes consistent with the module's forward: a=8, b..f=32.
    A, B, C, D, E, F = 8, 32, 32, 32, 32, 32

    inputs = jax.random.normal(k0, (A, B), dtype=jnp.float32)
    W1 = jax.random.normal(k1, (B, C), dtype=jnp.float32)
    W2 = jax.random.normal(k2, (C, D), dtype=jnp.float32)
    W3 = jax.random.normal(k3, (D, E), dtype=jnp.float32)
    W4 = jax.random.normal(k4, (E, F), dtype=jnp.float32)

    ref = jnp.einsum("ab,bc,cd,de,ef->af", inputs, W1, W2, W3, W4,
                     precision=jax.lax.Precision.HIGHEST)

    def rel_err(x, y):
        return float(jnp.max(jnp.abs(x - y)) / jnp.max(jnp.abs(y)))

    # Small-A -> chained-dot kernel path, default bf16 MXU operands.
    out = jax.block_until_ready(tensor_contract(inputs, W1, W2, W3, W4))
    assert out.shape == (A, F), out.shape
    assert rel_err(out, ref) < 5e-2, f"bf16 chain rel err: {rel_err(out, ref)}"

    # f32-operand path (tighter accuracy).
    out32 = jax.block_until_ready(
        tensor_contract(inputs, W1, W2, W3, W4, compute_dtype=jnp.float32))
    assert rel_err(out32, ref) < 2e-2, f"f32 chain rel err: {rel_err(out32, ref)}"

    # Larger A -> collapsed-weight streaming matmul, multi-step "parallel" grid.
    A2 = 384
    x2 = jax.random.normal(k5, (A2, B), dtype=jnp.float32)
    ref2 = jnp.einsum("ab,bc,cd,de,ef->af", x2, W1, W2, W3, W4,
                      precision=jax.lax.Precision.HIGHEST)
    out2 = jax.block_until_ready(tensor_contract(x2, W1, W2, W3, W4))
    assert out2.shape == (A2, F), out2.shape
    assert rel_err(out2, ref2) < 5e-2, f"bf16 collapsed rel err: {rel_err(out2, ref2)}"

    # Same shapes with the chained kernel forced (multi-tile grid on that path).
    out2c = jax.block_until_ready(
        tensor_contract(x2, W1, W2, W3, W4, compute_dtype=jnp.float32,
                        collapse=False))
    assert rel_err(out2c, ref2) < 2e-2, f"f32 tiled chain rel err: {rel_err(out2c, ref2)}"

    print("KERNEL_OK")
</pallas_src>

<mosaic_0001>
module attributes {stable_mosaic.version = 11 : i64} {
  func.func @_chain_kernel(%arg0: i32, %arg1: memref<8x32xf32, #tpu.memory_space<vmem>>, %arg2: memref<32x32xbf16, #tpu.memory_space<vmem>>, %arg3: memref<32x32xbf16, #tpu.memory_space<vmem>>, %arg4: memref<32x32xbf16, #tpu.memory_space<vmem>>, %arg5: memref<32x32xbf16, #tpu.memory_space<vmem>>, %arg6: memref<8x32xf32, #tpu.memory_space<vmem>>) attributes {dimension_semantics = [#tpu.dimension_semantics<parallel>], iteration_bounds = array<i64: 1>, scalar_prefetch = 0 : i64, scratch_operands = 0 : i64, tpu.core_type = #tpu.core_type<tc>, window_params = [{transform_indices = @transform_0, window_bounds = array<i64: 8, 32>}, {pipeline_mode = #tpu.pipeline_mode<synchronous>, transform_indices = @transform_1, window_bounds = array<i64: 32, 32>}, {pipeline_mode = #tpu.pipeline_mode<synchronous>, transform_indices = @transform_2, window_bounds = array<i64: 32, 32>}, {pipeline_mode = #tpu.pipeline_mode<synchronous>, transform_indices = @transform_3, window_bounds = array<i64: 32, 32>}, {pipeline_mode = #tpu.pipeline_mode<synchronous>, transform_indices = @transform_4, window_bounds = array<i64: 32, 32>}, {transform_indices = @transform_5, window_bounds = array<i64: 8, 32>}]} {
    %c0 = arith.constant 0 : index
    %c0_0 = arith.constant 0 : index
    %0 = vector.load %arg1[%c0, %c0_0] : memref<8x32xf32, #tpu.memory_space<vmem>>, vector<8x32xf32>
    %1 = arith.truncf %0 : vector<8x32xf32> to vector<8x32xbf16>
    %c0_1 = arith.constant 0 : index
    %c0_2 = arith.constant 0 : index
    %2 = vector.load %arg2[%c0_1, %c0_2] : memref<32x32xbf16, #tpu.memory_space<vmem>>, vector<32x32xbf16>
    %cst = arith.constant dense<0.000000e+00> : vector<8x32xf32>
    %3 = tpu.matmul %1, %2, %cst {dimension_numbers = #tpu.dot_dimension_numbers<[1], [0], [0], [1], [0, 0, 1, 1], [], []>} : vector<8x32xbf16>, vector<32x32xbf16>, vector<8x32xf32> -> vector<8x32xf32>
    %4 = arith.truncf %3 : vector<8x32xf32> to vector<8x32xbf16>
    %c0_3 = arith.constant 0 : index
    %c0_4 = arith.constant 0 : index
    %5 = vector.load %arg3[%c0_3, %c0_4] : memref<32x32xbf16, #tpu.memory_space<vmem>>, vector<32x32xbf16>
    %cst_5 = arith.constant dense<0.000000e+00> : vector<8x32xf32>
    %6 = tpu.matmul %4, %5, %cst_5 {dimension_numbers = #tpu.dot_dimension_numbers<[1], [0], [0], [1], [0, 0, 1, 1], [], []>} : vector<8x32xbf16>, vector<32x32xbf16>, vector<8x32xf32> -> vector<8x32xf32>
    %7 = arith.truncf %6 : vector<8x32xf32> to vector<8x32xbf16>
    %c0_6 = arith.constant 0 : index
    %c0_7 = arith.constant 0 : index
    %8 = vector.load %arg4[%c0_6, %c0_7] : memref<32x32xbf16, #tpu.memory_space<vmem>>, vector<32x32xbf16>
    %cst_8 = arith.constant dense<0.000000e+00> : vector<8x32xf32>
    %9 = tpu.matmul %7, %8, %cst_8 {dimension_numbers = #tpu.dot_dimension_numbers<[1], [0], [0], [1], [0, 0, 1, 1], [], []>} : vector<8x32xbf16>, vector<32x32xbf16>, vector<8x32xf32> -> vector<8x32xf32>
    %10 = arith.truncf %9 : vector<8x32xf32> to vector<8x32xbf16>
    %c0_9 = arith.constant 0 : index
    %c0_10 = arith.constant 0 : index
    %11 = vector.load %arg5[%c0_9, %c0_10] : memref<32x32xbf16, #tpu.memory_space<vmem>>, vector<32x32xbf16>
    %cst_11 = arith.constant dense<0.000000e+00> : vector<8x32xf32>
    %12 = tpu.matmul %10, %11, %cst_11 {dimension_numbers = #tpu.dot_dimension_numbers<[1], [0], [0], [1], [0, 0, 1, 1], [], []>} : vector<8x32xbf16>, vector<32x32xbf16>, vector<8x32xf32> -> vector<8x32xf32>
    %c0_12 = arith.constant 0 : index
    %c0_13 = arith.constant 0 : index
    %13 = vector.load %arg6[%c0_12, %c0_13] : memref<8x32xf32, #tpu.memory_space<vmem>>, vector<8x32xf32>
    tpu.vector_store %arg6[%c0_12, %c0_13], %12 {strides = array<i32>} : memref<8x32xf32, #tpu.memory_space<vmem>>, vector<8x32xf32>,
    return
  }
  func.func @transform_0(%arg0: i32) -> (i32, i32) {
    %c0_i32 = arith.constant 0 : i32
    %c0_i32_0 = arith.constant 0 : i32
    return %arg0, %c0_i32 : i32, i32
  }
  func.func @transform_1(%arg0: i32) -> (i32, i32) {
    %c0_i32 = arith.constant 0 : i32
    %c0_i32_0 = arith.constant 0 : i32
    %c0_i32_1 = arith.constant 0 : i32
    return %c0_i32, %c0_i32_0 : i32, i32
  }
  func.func @transform_2(%arg0: i32) -> (i32, i32) {
    %c0_i32 = arith.constant 0 : i32
    %c0_i32_0 = arith.constant 0 : i32
    %c0_i32_1 = arith.constant 0 : i32
    return %c0_i32, %c0_i32_0 : i32, i32
  }
  func.func @transform_3(%arg0: i32) -> (i32, i32) {
    %c0_i32 = arith.constant 0 : i32
    %c0_i32_0 = arith.constant 0 : i32
    %c0_i32_1 = arith.constant 0 : i32
    return %c0_i32, %c0_i32_0 : i32, i32
  }
  func.func @transform_4(%arg0: i32) -> (i32, i32) {
    %c0_i32 = arith.constant 0 : i32
    %c0_i32_0 = arith.constant 0 : i32
    %c0_i32_1 = arith.constant 0 : i32
    return %c0_i32, %c0_i32_0 : i32, i32
  }
  func.func @transform_5(%arg0: i32) -> (i32, i32) {
    %c0_i32 = arith.constant 0 : i32
    %c0_i32_0 = arith.constant 0 : i32
    return %arg0, %c0_i32 : i32, i32
  }
}

</mosaic_0001>

<llo_original>
// kernel: tpu_custom_call.1
$region0: #{tpu_custom_call.1}
  #allocation0 [shape = 'u32[]', space=smem, size = 0x4, offset = 0x4, fixed_abs, tag = 'smem constant byte address 0x4 - core index']
  #allocation1 [shape = 'u32[72,128]{1,0:T(1,128)}', space=vmem, size = 0x9000, scoped, tag = 'internal scratch']
  %s0 = inlined_call_operand.hbm [shape: f32[8,32], index: 0, kind: input, shape index: {}]
  %s1 = inlined_call_operand.hbm [shape: bf16[32,32], index: 1, kind: input, shape index: {}]
  %s2 = inlined_call_operand.hbm [shape: bf16[32,32], index: 2, kind: input, shape index: {}]
  %s3 = inlined_call_operand.hbm [shape: bf16[32,32], index: 3, kind: input, shape index: {}]
  %s4 = inlined_call_operand.hbm [shape: bf16[32,32], index: 4, kind: input, shape index: {}]
  %s5 = inlined_call_operand.hbm [shape: f32[8,32], index: 5, kind: output, shape index: {}]
  %s6 = sld [smem:[#allocation0]]
  $region50: #{tpu_custom_call.1} parent=0
    _
  %s8 = ssub.s32 1, %s6
  %s9 = scalar_select 0, %s8, %s6
  $region1: #{tpu_custom_call.1} parent=0
    #allocation2 [shape = 'u8[4096]{0}', space=vmem, size = 0x1000, scoped, tag = 'input window, operand 0, single buffered']
    #allocation3 [shape = 's32[1]{0}', space=sflag, size = 0x4, scoped, tag = 'scoped memory for tpu_custom_call.1']
    #allocation4 [shape = 's32[1]{0}', space=sflag, size = 0x4, scoped, tag = 'scoped memory for tpu_custom_call.1']
    #allocation5 [shape = 'u8[8192]{0}', space=vmem, size = 0x2000, scoped, tag = 'input window, operand 1, single buffered']
    #allocation6 [shape = 's32[1]{0}', space=sflag, size = 0x4, scoped, tag = 'scoped memory for tpu_custom_call.1']
    #allocation7 [shape = 'u8[8192]{0}', space=vmem, size = 0x2000, scoped, tag = 'input window, operand 2, single buffered']
    #allocation8 [shape = 'u8[8192]{0}', space=vmem, size = 0x2000, scoped, tag = 'input window, operand 3, single buffered']
    #allocation9 [shape = 's32[1]{0}', space=sflag, size = 0x4, scoped, tag = 'scoped memory for tpu_custom_call.1']
    #allocation10 [shape = 'u8[8192]{0}', space=vmem, size = 0x2000, scoped, tag = 'input window, operand 4, single buffered']
    #allocation11 [shape = 'u8[4096]{0}', space=vmem, size = 0x1000, scoped, tag = 'output window, operand 0, single buffered']
    %10 = vsyncpa [#allocation3], 0
    %11 = vsyncpa [#allocation6], 0
    %12 = vsyncpa [#allocation9], 0
    %13 = vsyncpa [#allocation4], 0
    // Predicated region
    $region2: #{tpu_custom_call.1} parent=1 // pred_check
      _
    $region3: #{tpu_custom_call.1} parent=1 // pred_check_branch
      %15 = sbr.rel (0) target = $region5
    $region4: #{tpu_custom_call.1} parent=1 // pred_region
      %17 = vsyncadd [#allocation3], 0
      %s19 = sshll.u32 %s0, 4
      %s20 = int_to_ptr.hbm [resolvable:$true] %s19
      %s21 = sshll.u32 [#allocation2], 4
      %s22 = int_to_ptr.vmem [resolvable:$true] %s21
      %24 = dma.hbm_to_vmem [thread:$0]  %s20, 128, %s22, [#allocation3]
    $region5: #{tpu_custom_call.1} parent=1 // pred_fallthru
      _
    // Predicated region
    $region6: #{tpu_custom_call.1} parent=1 // pred_check
      _
    $region7: #{tpu_custom_call.1} parent=1 // pred_check_branch
      %26 = sbr.rel (0) target = $region9
    $region8: #{tpu_custom_call.1} parent=1 // pred_region
      %28 = vsyncadd [#allocation6], 0
      %s29 = sshll.u32 %s1, 4
      %s30 = int_to_ptr.hbm [resolvable:$true] %s29
      %s31 = sshll.u32 [#allocation5], 4
      %s32 = int_to_ptr.vmem [resolvable:$true] %s31
      %37 = dma.hbm_to_vmem [thread:$0]  %s30, 256, %s32, [#allocation6], 64, 64, 4
    $region9: #{tpu_custom_call.1} parent=1 // pred_fallthru
      _
    // Predicated region
    $region10: #{tpu_custom_call.1} parent=1 // pred_check
      _
    $region11: #{tpu_custom_call.1} parent=1 // pred_check_branch
      %39 = sbr.rel (0) target = $region13
    $region12: #{tpu_custom_call.1} parent=1 // pred_region
      %41 = vsyncadd [#allocation6], 0
      %s42 = sshll.u32 %s2, 4
      %s43 = int_to_ptr.hbm [resolvable:$true] %s42
      %s44 = sshll.u32 [#allocation7], 4
      %s45 = int_to_ptr.vmem [resolvable:$true] %s44
      %50 = dma.hbm_to_vmem [thread:$0]  %s43, 256, %s45, [#allocation6], 64, 64, 4
    $region13: #{tpu_custom_call.1} parent=1 // pred_fallthru
      _
    // Predicated region
    $region14: #{tpu_custom_call.1} parent=1 // pred_check
      _
    $region15: #{tpu_custom_call.1} parent=1 // pred_check_branch
      %52 = sbr.rel (0) target = $region17
    $region16: #{tpu_custom_call.1} parent=1 // pred_region
      %54 = vsyncadd [#allocation9], 0
      %s55 = sshll.u32 %s3, 4
      %s56 = int_to_ptr.hbm [resolvable:$true] %s55
      %s57 = sshll.u32 [#allocation8], 4
      %s58 = int_to_ptr.vmem [resolvable:$true] %s57
      %63 = dma.hbm_to_vmem [thread:$0]  %s56, 256, %s58, [#allocation9], 64, 64, 4
    $region17: #{tpu_custom_call.1} parent=1 // pred_fallthru
      _
    // Predicated region
    $region18: #{tpu_custom_call.1} parent=1 // pred_check
      _
    $region19: #{tpu_custom_call.1} parent=1 // pred_check_branch
      %65 = sbr.rel (0) target = $region21
    $region20: #{tpu_custom_call.1} parent=1 // pred_region
      %67 = vsyncadd [#allocation9], 0
      %s68 = sshll.u32 %s4, 4
      %s69 = int_to_ptr.hbm [resolvable:$true] %s68
      %s70 = sshll.u32 [#allocation10], 4
      %s71 = int_to_ptr.vmem [resolvable:$true] %s70
      %76 = dma.hbm_to_vmem [thread:$0]  %s69, 256, %s71, [#allocation9], 64, 64, 4
    $region21: #{tpu_custom_call.1} parent=1 // pred_fallthru
      _
    // Predicated region
    $region22: #{tpu_custom_call.1} parent=1 // pred_check
      _
    $region23: #{tpu_custom_call.1} parent=1 // pred_check_branch
      %78 = sbr.rel (0) target = $region25
    $region24: #{tpu_custom_call.1} parent=1 // pred_region
      %80 = dma.done [#allocation3], 128
    $region25: #{tpu_custom_call.1} parent=1 // pred_fallthru
      _
    // Predicated region
    $region26: #{tpu_custom_call.1} parent=1 // pred_check
      _
    $region27: #{tpu_custom_call.1} parent=1 // pred_check_branch
      %82 = sbr.rel (0) target = $region29
    $region28: #{tpu_custom_call.1} parent=1 // pred_region
      %84 = dma.done [#allocation6], 256
    $region29: #{tpu_custom_call.1} parent=1 // pred_fallthru
      _
    // Predicated region
    $region30: #{tpu_custom_call.1} parent=1 // pred_check
      _
    $region31: #{tpu_custom_call.1} parent=1 // pred_check_branch
      %86 = sbr.rel (0) target = $region33
    $region32: #{tpu_custom_call.1} parent=1 // pred_region
      %88 = dma.done [#allocation6], 256
    $region33: #{tpu_custom_call.1} parent=1 // pred_fallthru
      _
    // Predicated region
    $region34: #{tpu_custom_call.1} parent=1 // pred_check
      _
    $region35: #{tpu_custom_call.1} parent=1 // pred_check_branch
      %90 = sbr.rel (0) target = $region37
    $region36: #{tpu_custom_call.1} parent=1 // pred_region
      %92 = dma.done [#allocation9], 256
    $region37: #{tpu_custom_call.1} parent=1 // pred_fallthru
      _
    // Predicated region
    $region38: #{tpu_custom_call.1} parent=1 // pred_check
      _
    $region39: #{tpu_custom_call.1} parent=1 // pred_check_branch
      %94 = sbr.rel (0) target = $region41
    $region40: #{tpu_custom_call.1} parent=1 // pred_region
      %96 = dma.done [#allocation9], 256
    $region41: #{tpu_custom_call.1} parent=1 // pred_fallthru
      _
    %v98 = vld [vmem:[#allocation2] sm:$0xff]
    %v99 = vpack.c.bf16 %v98, %v98
    %v100 = vld [vmem:[#allocation5] sm:$0xf]
    %v101 = vld [vmem:[#allocation5 + $0x4] sm:$0xf]
    %v102 = vld [vmem:[#allocation5 + $0x8] sm:$0xf]
    %v103 = vld [vmem:[#allocation5 + $0xc] sm:$0xf]
    %v108 = vunpack.c.l.b16 %v100
    %v109 = vunpack.c.l.b16 %v101
    %v110 = vunpack.c.l.b16 %v102
    %v111 = vunpack.c.l.b16 %v103
    %v112 = vpack.c.b16 %v109, %v108
    %v113 = vpack.c.b16 %v111, %v110
    %vm116 = vcmask 261120
    %v118 = vsel %vm116, %v99, 0
    %120 = vmatpush.bf16.msra.mxu0 0
    %121 = vmatpush.bf16.msra.mxu0 0
    %122 = vmatpush.bf16.msra.mxu0 0
    %123 = vmatpush.bf16.msra.mxu0 0
    %124 = vmatpush.bf16.msra.mxu0 0
    %125 = vmatpush.bf16.msra.mxu0 0
    %126 = vmatpush.bf16.msra.mxu0 %v113
    %127 = vmatpush.bf16.msra.mxu0 %v112
    %128 = vmatmul.bf16.gmra.mxu0 %v118
    %v129 = vpop.f32.mrf.mxu0
    %v130 = vadd.f32 0.0, %v129
    %v131 = vpop.f32.mrf.mxu0
    %132 = vdwg.mxu0
    %v133 = vpack.c.bf16 %v130, %v130
    %v134 = vld [vmem:[#allocation7] sm:$0xf]
    %v135 = vld [vmem:[#allocation7 + $0x4] sm:$0xf]
    %v136 = vld [vmem:[#allocation7 + $0x8] sm:$0xf]
    %v137 = vld [vmem:[#allocation7 + $0xc] sm:$0xf]
    %v142 = vunpack.c.l.b16 %v134
    %v143 = vunpack.c.l.b16 %v135
    %v144 = vunpack.c.l.b16 %v136
    %v145 = vunpack.c.l.b16 %v137
    %v146 = vpack.c.b16 %v143, %v142
    %v147 = vpack.c.b16 %v145, %v144
    %v151 = vsel %vm116, %v133, 0
    %153 = vmatpush.bf16.msra.mxu0 0
    %154 = vmatpush.bf16.msra.mxu0 0
    %155 = vmatpush.bf16.msra.mxu0 0
    %156 = vmatpush.bf16.msra.mxu0 0
    %157 = vmatpush.bf16.msra.mxu0 0
    %158 = vmatpush.bf16.msra.mxu0 0
    %159 = vmatpush.bf16.msra.mxu0 %v147
    %160 = vmatpush.bf16.msra.mxu0 %v146
    %161 = vmatmul.bf16.gmra.mxu0 %v151
    %v162 = vpop.f32.mrf.mxu0
    %v163 = vadd.f32 0.0, %v162
    %v164 = vpop.f32.mrf.mxu0
    %165 = vdwg.mxu0
    %v166 = vpack.c.bf16 %v163, %v163
    %v167 = vld [vmem:[#allocation8] sm:$0xf]
    %v168 = vld [vmem:[#allocation8 + $0x4] sm:$0xf]
    %v169 = vld [vmem:[#allocation8 + $0x8] sm:$0xf]
    %v170 = vld [vmem:[#allocation8 + $0xc] sm:$0xf]
    %v175 = vunpack.c.l.b16 %v167
    %v176 = vunpack.c.l.b16 %v168
    %v177 = vunpack.c.l.b16 %v169
    %v178 = vunpack.c.l.b16 %v170
    %v179 = vpack.c.b16 %v176, %v175
    %v180 = vpack.c.b16 %v178, %v177
    %v184 = vsel %vm116, %v166, 0
    %186 = vmatpush.bf16.msra.mxu0 0
    %187 = vmatpush.bf16.msra.mxu0 0
    %188 = vmatpush.bf16.msra.mxu0 0
    %189 = vmatpush.bf16.msra.mxu0 0
    %190 = vmatpush.bf16.msra.mxu0 0
    %191 = vmatpush.bf16.msra.mxu0 0
    %192 = vmatpush.bf16.msra.mxu0 %v180
    %193 = vmatpush.bf16.msra.mxu0 %v179
    %194 = vmatmul.bf16.gmra.mxu0 %v184
    %v195 = vpop.f32.mrf.mxu0
    %v196 = vadd.f32 0.0, %v195
    %v197 = vpop.f32.mrf.mxu0
    %198 = vdwg.mxu0
    %v199 = vpack.c.bf16 %v196, %v196
    %v200 = vld [vmem:[#allocation10] sm:$0xf]
    %v201 = vld [vmem:[#allocation10 + $0x4] sm:$0xf]
    %v202 = vld [vmem:[#allocation10 + $0x8] sm:$0xf]
    %v203 = vld [vmem:[#allocation10 + $0xc] sm:$0xf]
    %v208 = vunpack.c.l.b16 %v200
    %v209 = vunpack.c.l.b16 %v201
    %v210 = vunpack.c.l.b16 %v202
    %v211 = vunpack.c.l.b16 %v203
    %v212 = vpack.c.b16 %v209, %v208
    %v213 = vpack.c.b16 %v211, %v210
    %v217 = vsel %vm116, %v199, 0
    %219 = vmatpush.bf16.msra.mxu0 0
    %220 = vmatpush.bf16.msra.mxu0 0
    %221 = vmatpush.bf16.msra.mxu0 0
    %222 = vmatpush.bf16.msra.mxu0 0
    %223 = vmatpush.bf16.msra.mxu0 0
    %224 = vmatpush.bf16.msra.mxu0 0
    %225 = vmatpush.bf16.msra.mxu0 %v213
    %226 = vmatpush.bf16.msra.mxu0 %v212
    %227 = vmatmul.bf16.gmra.mxu0 %v217
    %v228 = vpop.f32.mrf.mxu0
    %v229 = vadd.f32 0.0, %v228
    %v230 = vpop.f32.mrf.mxu0
    %231 = vdwg.mxu0
    %232 = vst.msk [vmem:[#allocation11] sm:$0xff] %vm116, %v229
    // Predicated region
    $region42: #{tpu_custom_call.1} parent=1 // pred_check
      _
    $region43: #{tpu_custom_call.1} parent=1 // pred_check_branch
      %234 = sbr.rel (0) target = $region45
    $region44: #{tpu_custom_call.1} parent=1 // pred_region
      %236 = vsyncadd [#allocation4], 0
      %s238 = sshll.u32 [#allocation11], 4
      %s239 = int_to_ptr.vmem [resolvable:$true] %s238
      %s240 = sshll.u32 %s5, 4
      %s241 = int_to_ptr.hbm [resolvable:$true] %s240
      %243 = dma.vmem_to_hbm [thread:$0]  %s239, 128, %s241, [#allocation4]
    $region45: #{tpu_custom_call.1} parent=1 // pred_fallthru
      _
    // Predicated region
    $region46: #{tpu_custom_call.1} parent=1 // pred_check
      _
    $region47: #{tpu_custom_call.1} parent=1 // pred_check_branch
      %245 = sbr.rel (0) target = $region49
    $region48: #{tpu_custom_call.1} parent=1 // pred_region
      %247 = dma.done [#allocation4], 128
    $region49: #{tpu_custom_call.1} parent=1 // pred_fallthru
      _
    %248 = vsyncpa [#allocation3], 1
    %249 = vsyncpa [#allocation6], 1
    %250 = vsyncpa [#allocation9], 1
    %251 = vsyncpa [#allocation4], 1

</llo_original>
